<compile_context>
chip_gen: v7x
topology: tpu7x:2x2x1
jax: 0.10.0
libtpu: 0.0.40
codegen_flags: <defaults>
</compile_context>

<pallas_src>
import jax
import jax.numpy as jnp
from jax.experimental import pallas as pl
from jax.experimental.pallas import tpu as pltpu

_SUBLANES = 8  # row tiles must be a multiple of 8 sublanes


def _fused_linear_kernel(x_ref, w_ref, b_ref, o_ref):
    # (tb, 8) @ (8, C) -> (tb, C), f32 accumulate on the MXU, then bias add.
    y = jnp.dot(x_ref[...], w_ref[...], preferred_element_type=jnp.float32)
    o_ref[...] = (y + b_ref[...]).astype(o_ref.dtype)


def fuse_params(w1, b1, w2, b2):
    """Fold the two activation-free linears into one (done once, outside the hot path)."""
    wf = jnp.dot(w1, w2, preferred_element_type=jnp.float32)        # (8, C)
    bf = jnp.dot(b1, w2, preferred_element_type=jnp.float32) + b2   # (1, C)
    return wf, bf


def _pick_row_tile(B, block_rows):
    # Multiple of 8, at most block_rows, and ~ceil(B/2) so mid-size batches
    # still produce >= 2 grid steps (both TensorCores busy on v7x).
    half = _SUBLANES * pl.cdiv(max(B, 1), 2 * _SUBLANES)
    tb = max(_SUBLANES, min(block_rows, half))
    return _SUBLANES * pl.cdiv(tb, _SUBLANES)


def net_forward(x, wf, bf, *, block_rows=4096):
    """Forward pass of `net`: fc2(fc1(x)) with pre-fused params.

    x:  (B, 8) f32
    wf: (8, C) fused weight, bf: (1, C) fused bias (see fuse_params)
    returns (B, C) f32
    """
    B, K = x.shape
    C = wf.shape[1]

    if B == 0:  # degenerate batch: nothing to launch
        return jnp.zeros((0, C), x.dtype)

    tb = _pick_row_tile(B, block_rows)
    grid = (pl.cdiv(B, tb),)  # partial last block is masked by Pallas

    cost = pl.CostEstimate(
        flops=2 * B * K * C,
        transcendentals=0,
        bytes_accessed=B * (K + C) * 4 + (K * C + C) * 4,
    )

    return pl.pallas_call(
        _fused_linear_kernel,
        out_shape=jax.ShapeDtypeStruct((B, C), x.dtype),
        grid=grid,
        in_specs=[
            pl.BlockSpec((tb, K), lambda i: (i, 0)),  # x: tiled over batch
            pl.BlockSpec((K, C), lambda i: (0, 0)),   # fused weight: VMEM-resident
            pl.BlockSpec((1, C), lambda i: (0, 0)),   # fused bias: VMEM-resident
        ],
        out_specs=pl.BlockSpec((tb, C), lambda i: (i, 0)),  # true (B, C), no padding
        compiler_params=pltpu.CompilerParams(
            dimension_semantics=("parallel",),  # 2 TCs on v7x
        ),
        cost_estimate=cost,
    )(x, wf, bf)


def init_params(key, num_class=10):
    """Deterministic init mimicking nn.Linear's U(-1/sqrt(fan_in), 1/sqrt(fan_in))."""
    k1, k2, k3, k4 = jax.random.split(key, 4)
    bound1 = 1.0 / jnp.sqrt(8.0)
    bound2 = 1.0 / jnp.sqrt(4.0)
    # Stored already transposed: (in, out)
    w1 = jax.random.uniform(k1, (8, 4), jnp.float32, -bound1, bound1)
    b1 = jax.random.uniform(k2, (1, 4), jnp.float32, -bound1, bound1)
    w2 = jax.random.uniform(k3, (4, num_class), jnp.float32, -bound2, bound2)
    b2 = jax.random.uniform(k4, (1, num_class), jnp.float32, -bound2, bound2)
    return w1, b1, w2, b2


if __name__ == "__main__":
    key = jax.random.PRNGKey(0)
    kx, kx2, kp = jax.random.split(key, 3)

    w1, b1, w2, b2 = init_params(kp, num_class=10)
    wf, bf = fuse_params(w1, b1, w2, b2)  # hoisted out of the per-call path

    def ref(x):
        # Plain-JAX reference matching PyTorch fc2(fc1(x)).
        return (x @ w1 + b1) @ w2 + b2

    # Small batch (single grid step, full blocks).
    B = 8
    x = jax.random.normal(kx, (B, 8), dtype=jnp.float32)
    y = jax.block_until_ready(net_forward(x, wf, bf))
    assert y.shape == (B, 10)
    assert jnp.allclose(y, ref(x), atol=1e-5, rtol=1e-4)

    # Odd batch + tiny row tile: exercises the masked partial last block and a
    # multi-step batch grid (tb=8 -> 3 grid steps over 21 rows).
    B2 = 21
    x2 = jax.random.normal(kx2, (B2, 8), dtype=jnp.float32)
    y2 = jax.block_until_ready(net_forward(x2, wf, bf, block_rows=8))
    assert y2.shape == (B2, 10)
    assert jnp.allclose(y2, ref(x2), atol=1e-5, rtol=1e-4)

    # Odd batch with default tiling (2 grid steps via the >=2-step heuristic).
    y3 = jax.block_until_ready(net_forward(x2, wf, bf))
    assert y3.shape == (B2, 10)
    assert jnp.allclose(y3, ref(x2), atol=1e-5, rtol=1e-4)

    print("KERNEL_OK")
</pallas_src>

<mosaic_0001>
module attributes {stable_mosaic.version = 11 : i64} {
  func.func @_fused_linear_kernel(%arg0: i32, %arg1: memref<8x8xf32, #tpu.memory_space<vmem>>, %arg2: memref<8x10xf32, #tpu.memory_space<vmem>>, %arg3: memref<1x10xf32, #tpu.memory_space<vmem>>, %arg4: memref<8x10xf32, #tpu.memory_space<vmem>>) attributes {dimension_semantics = [#tpu.dimension_semantics<parallel>], iteration_bounds = array<i64: 1>, scalar_prefetch = 0 : i64, scratch_operands = 0 : i64, tpu.core_type = #tpu.core_type<tc>, window_params = [{transform_indices = @transform_0, window_bounds = array<i64: 8, 8>}, {pipeline_mode = #tpu.pipeline_mode<synchronous>, transform_indices = @transform_1, window_bounds = array<i64: 8, 10>}, {pipeline_mode = #tpu.pipeline_mode<synchronous>, transform_indices = @transform_2, window_bounds = array<i64: 1, 10>}, {transform_indices = @transform_3, window_bounds = array<i64: 8, 10>}]} {
    %c0 = arith.constant 0 : index
    %c0_0 = arith.constant 0 : index
    %0 = vector.load %arg1[%c0, %c0_0] : memref<8x8xf32, #tpu.memory_space<vmem>>, vector<8x8xf32>
    %c0_1 = arith.constant 0 : index
    %c0_2 = arith.constant 0 : index
    %1 = vector.load %arg2[%c0_1, %c0_2] : memref<8x10xf32, #tpu.memory_space<vmem>>, vector<8x10xf32>
    %cst = arith.constant dense<0.000000e+00> : vector<8x10xf32>
    %2 = tpu.matmul %0, %1, %cst {dimension_numbers = #tpu.dot_dimension_numbers<[1], [0], [0], [1], [0, 0, 1, 1], [], []>} : vector<8x8xf32>, vector<8x10xf32>, vector<8x10xf32> -> vector<8x10xf32>
    %c0_3 = arith.constant 0 : index
    %c0_4 = arith.constant 0 : index
    %3 = vector.load %arg3[%c0_3, %c0_4] : memref<1x10xf32, #tpu.memory_space<vmem>>, vector<1x10xf32>
    %4 = vector.broadcast %3 : vector<1x10xf32> to vector<8x10xf32>
    %5 = arith.addf %2, %4 : vector<8x10xf32>
    %c0_5 = arith.constant 0 : index
    %c0_6 = arith.constant 0 : index
    %6 = vector.load %arg4[%c0_5, %c0_6] : memref<8x10xf32, #tpu.memory_space<vmem>>, vector<8x10xf32>
    tpu.vector_store %arg4[%c0_5, %c0_6], %5 {strides = array<i32>} : memref<8x10xf32, #tpu.memory_space<vmem>>, vector<8x10xf32>,
    return
  }
  func.func @transform_0(%arg0: i32) -> (i32, i32) {
    %c0_i32 = arith.constant 0 : i32
    %c0_i32_0 = arith.constant 0 : i32
    return %arg0, %c0_i32 : i32, i32
  }
  func.func @transform_1(%arg0: i32) -> (i32, i32) {
    %c0_i32 = arith.constant 0 : i32
    %c0_i32_0 = arith.constant 0 : i32
    %c0_i32_1 = arith.constant 0 : i32
    return %c0_i32, %c0_i32_0 : i32, i32
  }
  func.func @transform_2(%arg0: i32) -> (i32, i32) {
    %c0_i32 = arith.constant 0 : i32
    %c0_i32_0 = arith.constant 0 : i32
    %c0_i32_1 = arith.constant 0 : i32
    return %c0_i32, %c0_i32_0 : i32, i32
  }
  func.func @transform_3(%arg0: i32) -> (i32, i32) {
    %c0_i32 = arith.constant 0 : i32
    %c0_i32_0 = arith.constant 0 : i32
    return %arg0, %c0_i32 : i32, i32
  }
}

</mosaic_0001>

<llo_original>
// kernel: tpu_custom_call.1
$region0: #{tpu_custom_call.1}
  #allocation0 [shape = 'u32[]', space=smem, size = 0x4, offset = 0x4, fixed_abs, tag = 'smem constant byte address 0x4 - core index']
  #allocation1 [shape = 'u32[144,128]{1,0:T(1,128)}', space=vmem, size = 0x12000, scoped, tag = 'internal scratch']
  %s0 = inlined_call_operand.hbm [shape: f32[8,8], index: 0, kind: input, shape index: {}]
  %s1 = inlined_call_operand.hbm [shape: f32[8,10], index: 1, kind: input, shape index: {}]
  %s2 = inlined_call_operand.vmem [shape: f32[1,10], index: 2, kind: input, shape index: {}]
  %s3 = inlined_call_operand.hbm [shape: f32[8,10], index: 3, kind: output, shape index: {}]
  %s4 = sld [smem:[#allocation0]]
  $region30: #{tpu_custom_call.1} parent=0
    _
  %s6 = ssub.s32 1, %s4
  %s7 = scalar_select 0, %s6, %s4
  $region1: #{tpu_custom_call.1} parent=0
    #allocation2 [shape = 'u8[4096]{0}', space=vmem, size = 0x1000, scoped, tag = 'input window, operand 0, single buffered']
    #allocation3 [shape = 's32[1]{0}', space=sflag, size = 0x4, scoped, tag = 'scoped memory for tpu_custom_call.1']
    #allocation4 [shape = 's32[1]{0}', space=sflag, size = 0x4, scoped, tag = 'scoped memory for tpu_custom_call.1']
    #allocation5 [shape = 'u8[4096]{0}', space=vmem, size = 0x1000, scoped, tag = 'input window, operand 1, single buffered']
    #allocation6 [shape = 's32[1]{0}', space=sflag, size = 0x4, scoped, tag = 'scoped memory for tpu_custom_call.1']
    #allocation7 [shape = 'u8[4096]{0}', space=vmem, size = 0x1000, scoped, tag = 'output window, operand 0, single buffered']
    %8 = vsyncpa [#allocation3], 0
    %9 = vsyncpa [#allocation6], 0
    %10 = vsyncpa [#allocation4], 0
    // Predicated region
    $region2: #{tpu_custom_call.1} parent=1 // pred_check
      _
    $region3: #{tpu_custom_call.1} parent=1 // pred_check_branch
      %12 = sbr.rel (0) target = $region5
    $region4: #{tpu_custom_call.1} parent=1 // pred_region
      %s14 = ssub.s32 128, 128
      %15 = vsyncadd [#allocation3], %s14
      %s17 = sshll.u32 [#allocation2], 4
      %s18 = int_to_ptr.vmem [resolvable:$true] %s17
      %20 = dma.hbm_to_vmem [thread:$0]  %s0, 128, %s18, [#allocation3]
    $region5: #{tpu_custom_call.1} parent=1 // pred_fallthru
      _
    // Predicated region
    $region6: #{tpu_custom_call.1} parent=1 // pred_check
      _
    $region7: #{tpu_custom_call.1} parent=1 // pred_check_branch
      %22 = sbr.rel (0) target = $region9
    $region8: #{tpu_custom_call.1} parent=1 // pred_region
      %s24 = ssub.s32 128, 128
      %25 = vsyncadd [#allocation6], %s24
      %s27 = sshll.u32 [#allocation5], 4
      %s28 = int_to_ptr.vmem [resolvable:$true] %s27
      %30 = dma.hbm_to_vmem [thread:$0]  %s1, 128, %s28, [#allocation6]
    $region9: #{tpu_custom_call.1} parent=1 // pred_fallthru
      _
    // Predicated region
    $region10: #{tpu_custom_call.1} parent=1 // pred_check
      _
    $region11: #{tpu_custom_call.1} parent=1 // pred_check_branch
      %32 = sbr.rel (0) target = $region13
    $region12: #{tpu_custom_call.1} parent=1 // pred_region
      _
    $region13: #{tpu_custom_call.1} parent=1 // pred_fallthru
      _
    // Predicated region
    $region14: #{tpu_custom_call.1} parent=1 // pred_check
      _
    $region15: #{tpu_custom_call.1} parent=1 // pred_check_branch
      %34 = sbr.rel (0) target = $region17
    $region16: #{tpu_custom_call.1} parent=1 // pred_region
      %35 = dma.done [#allocation3], 128
    $region17: #{tpu_custom_call.1} parent=1 // pred_fallthru
      _
    // Predicated region
    $region18: #{tpu_custom_call.1} parent=1 // pred_check
      _
    $region19: #{tpu_custom_call.1} parent=1 // pred_check_branch
      %37 = sbr.rel (0) target = $region21
    $region20: #{tpu_custom_call.1} parent=1 // pred_region
      %38 = dma.done [#allocation6], 128
    $region21: #{tpu_custom_call.1} parent=1 // pred_fallthru
      _
    %v39 = vld [vmem:[#allocation2] sm:$0xff]
    %v40 = vld [vmem:[#allocation5] sm:$0xff]
    %v41 = vld [vmem:[%s2] sm:$0x1]
    %v43 = vlaneseq
    %v44 = vshrl.u32 %v43, 7
    %v45 = vsub.s32 0, %v44
    %v46 = vrot.slane %v41, %v45
    %vm48 = vcmask 64512
    %v50 = vsel %vm48, %v39, 0
    %52 = vmatprep.subr.mxu0 0.0
    %53 = vmatpush1.msra.mxu0 %v40
    %54 = vmatprep.subr.mxu0 0.0
    %55 = vmatpush1.msra.mxu0 0.0
    %56 = vmatprep.subr.mxu0 0.0
    %57 = vmatpush1.msra.mxu0 0.0
    %58 = vmatprep.subr.mxu0 0.0
    %59 = vmatpush1.msra.mxu0 0.0
    %60 = vmatprep.subr.mxu0 0.0
    %61 = vmatpush1.msra.mxu0 0.0
    %62 = vmatprep.subr.mxu0 0.0
    %63 = vmatpush1.msra.mxu0 0.0
    %64 = vmatprep.subr.mxu0 0.0
    %65 = vmatpush1.msra.mxu0 0.0
    %66 = vmatprep.subr.mxu0 0.0
    %67 = vmatpush1.msra.mxu0 0.0
    %68 = vmatprep.subr.mxu0 0.0
    %69 = vmatpush1.msra.mxu0 0.0
    %70 = vmatprep.subr.mxu0 0.0
    %71 = vmatpush1.msra.mxu0 0.0
    %72 = vmatprep.subr.mxu0 0.0
    %73 = vmatpush1.msra.mxu0 0.0
    %74 = vmatprep.subr.mxu0 0.0
    %75 = vmatpush1.msra.mxu0 0.0
    %76 = vmatprep.subr.mxu0 0.0
    %77 = vmatpush1.msra.mxu0 0.0
    %78 = vmatprep.subr.mxu0 0.0
    %79 = vmatpush1.msra.mxu0 0.0
    %80 = vmatprep.subr.mxu0 0.0
    %81 = vmatpush1.msra.mxu0 0.0
    %82 = vmatprep.subr.mxu0 0.0
    %83 = vmatpush1.msra.mxu0 0.0
    %84 = vmatprep.subr.mxu0 0.0
    %85 = vmatpush1.msra.mxu0 0.0
    %86 = vmatprep.subr.mxu0 0.0
    %87 = vmatpush1.msra.mxu0 0.0
    %88 = vmatprep.subr.mxu0 0.0
    %89 = vmatpush1.msra.mxu0 0.0
    %90 = vmatprep.subr.mxu0 0.0
    %91 = vmatpush1.msra.mxu0 0.0
    %92 = vmatprep.subr.mxu0 0.0
    %93 = vmatpush1.msra.mxu0 0.0
    %94 = vmatprep.subr.mxu0 0.0
    %95 = vmatpush1.msra.mxu0 0.0
    %96 = vmatprep.subr.mxu0 0.0
    %97 = vmatpush1.msra.mxu0 0.0
    %98 = vmatprep.subr.mxu0 0.0
    %99 = vmatpush1.msra.mxu0 0.0
    %100 = vmatprep.subr.mxu0 0.0
    %101 = vmatpush1.msra.mxu0 0.0
    %102 = vmatprep.subr.mxu0 0.0
    %103 = vmatpush1.msra.mxu0 0.0
    %104 = vmatprep.subr.mxu0 0.0
    %105 = vmatpush1.msra.mxu0 0.0
    %106 = vmatprep.subr.mxu0 0.0
    %107 = vmatpush1.msra.mxu0 0.0
    %108 = vmatprep.subr.mxu0 0.0
    %109 = vmatpush1.msra.mxu0 0.0
    %110 = vmatprep.subr.mxu0 0.0
    %111 = vmatpush1.msra.mxu0 0.0
    %112 = vmatprep.subr.mxu0 0.0
    %113 = vmatpush1.msra.mxu0 0.0
    %114 = vmatprep.subr.mxu0 0.0
    %115 = vmatpush1.msra.mxu0 0.0
    %116 = vmatprep.mubr.f32.mxu0 0.0
    %117 = vmatmul.mubr.f32.gmra.mrb[0].mxu0 %v50
    %v118 = vpop.f32.mrb[0].mxu0
    %v119 = vadd.f32 %v46, %v118
    %v120 = vpop.f32.mrb[0].mxu0
    %121 = vdwg.mxu0
    %vm122 = vcmask 80896
    %123 = vst.msk [vmem:[#allocation7] sm:$0xff] %vm122, %v119
    // Predicated region
    $region22: #{tpu_custom_call.1} parent=1 // pred_check
      _
    $region23: #{tpu_custom_call.1} parent=1 // pred_check_branch
      %125 = sbr.rel (0) target = $region25
    $region24: #{tpu_custom_call.1} parent=1 // pred_region
      %s127 = ssub.s32 128, 128
      %128 = vsyncadd [#allocation4], %s127
      %s130 = sshll.u32 [#allocation7], 4
      %s131 = int_to_ptr.vmem [resolvable:$true] %s130
      %133 = dma.vmem_to_hbm [thread:$0]  %s131, 128, %s3, [#allocation4]
    $region25: #{tpu_custom_call.1} parent=1 // pred_fallthru
      _
    // Predicated region
    $region26: #{tpu_custom_call.1} parent=1 // pred_check
      _
    $region27: #{tpu_custom_call.1} parent=1 // pred_check_branch
      %135 = sbr.rel (0) target = $region29
    $region28: #{tpu_custom_call.1} parent=1 // pred_region
      %136 = dma.done [#allocation4], 128
    $region29: #{tpu_custom_call.1} parent=1 // pred_fallthru
      _
    %137 = vsyncpa [#allocation3], 1
    %138 = vsyncpa [#allocation6], 1
    %139 = vsyncpa [#allocation4], 1

</llo_original>
